<compile_context>
chip_gen: v6e
topology: v6e:2x2x1
jax: 0.10.0
libtpu: 0.0.40
codegen_flags: <defaults>
</compile_context>

<pallas_src>
import jax
import jax.numpy as jnp
from jax.experimental import pallas as pl
from jax.experimental.pallas import tpu as pltpu


def _masked_softmax_kernel(vl_ref, x_ref, o_ref):
    """One grid step handles a (TR, K) tile of flattened score rows.

    vl_ref : (TR, 1) int32 valid length per row (lane-broadcast compare)
    x_ref  : (TR, K) scores tile (caller dtype, e.g. bf16 / f32)
    o_ref  : (TR, K) softmax output tile (caller dtype)
    """
    x = x_ref[...].astype(jnp.float32)                        # compute in f32
    vl = vl_ref[...]                                          # (TR, 1) int32
    # Hoisted (1, K) column index -> no (TR, K) int32 temporary.
    col = jax.lax.broadcasted_iota(jnp.int32, (1, x.shape[-1]), 1)
    mask = col < vl                                           # (TR, K) bool

    # Match PyTorch: masked positions get -1e6, then stabilized softmax.
    xm = jnp.where(mask, x, jnp.float32(-1.0e6))
    m = jnp.max(xm, axis=-1, keepdims=True)
    e = jnp.exp(xm - m)
    s = jnp.sum(e, axis=-1, keepdims=True)

    inv = pl.reciprocal(s, approx=True)                       # EUP slot, ~free
    inv = inv * (2.0 - s * inv)                               # Newton -> f32-accurate
    o_ref[...] = (e * inv).astype(o_ref.dtype)


def _vmem_capacity_bytes():
    try:
        return int(pltpu.get_tpu_info().vmem_capacity_bytes)
    except Exception:
        return 64 * 1024 * 1024  # conservative fallback (v7x per-TC VMEM)


def masked_softmax(X, valid_lens=None, *, target_block_bytes=4 * 1024 * 1024):
    """Pallas equivalent of Attention._masked_softmax.

    X          : (B, Q, K) attention scores (f32 or bf16); output keeps X.dtype.
    valid_lens : None, (B,) or (B, Q) integer valid lengths along K.
    """
    B, Q, K = X.shape
    out_dtype = X.dtype
    itemsize = jnp.dtype(out_dtype).itemsize
    R = B * Q

    # Normalize valid lens to (R, 1) int32 (tiny arrays; negligible cost).
    if valid_lens is None:
        vl = jnp.full((R, 1), K, dtype=jnp.int32)
    elif valid_lens.ndim == 1:
        # torch.repeat_interleave(valid_lens, Q) == broadcast over query rows.
        vl = jnp.broadcast_to(valid_lens.astype(jnp.int32)[:, None], (B, Q)).reshape(R, 1)
    else:
        vl = valid_lens.astype(jnp.int32).reshape(R, 1)

    # Flatten (B, Q) -> rows: contiguous reshape, no data movement.
    Xf = X.reshape(R, K)

    # Need at least 8 rows for an (8, ...) sublane tile; pad only this rare,
    # tiny case (avoids relying on block_dim > array_dim behaviour).
    Rp = R
    if R < 8:
        Rp = 8
        Xf = jnp.pad(Xf, ((0, Rp - R), (0, 0)))
        vl = jnp.pad(vl, ((0, Rp - R), (0, 0)), constant_values=K)

    # ---- per-generation VMEM budget ----
    vmem_cap = _vmem_capacity_bytes()                          # 64 MiB (v7x) / 128 MiB (v5e/v6e)
    budget = min(int(vmem_cap * 0.55), 48 * 1024 * 1024)       # leave headroom

    # Steady-state per-row footprint:
    #   double-buffered in + out blocks : 4 * itemsize bytes / element
    #   f32 in-kernel temporaries       : ~3 * 4 bytes / element
    bytes_per_row = K * (4 * itemsize + 12) + 16
    tr_budget = max(8, (budget // bytes_per_row) // 8 * 8)
    tr_target = max(8, (target_block_bytes // (K * itemsize)) // 8 * 8)
    tr_rows = max(8, (Rp // 8) * 8)                            # never exceed row count
    TR = max(8, min(tr_budget, tr_target, tr_rows))

    grid = (pl.cdiv(Rp, TR),)                                  # partial last block OK
    vmem_limit = int(min(vmem_cap, budget + 16 * 1024 * 1024))

    out = pl.pallas_call(
        _masked_softmax_kernel,
        out_shape=jax.ShapeDtypeStruct((Rp, K), out_dtype),
        grid_spec=pltpu.PrefetchScalarGridSpec(
            num_scalar_prefetch=0,
            grid=grid,
            in_specs=[
                pl.BlockSpec((TR, 1), lambda r: (r, 0)),       # valid lens
                pl.BlockSpec((TR, K), lambda r: (r, 0)),       # score rows (full K)
            ],
            out_specs=pl.BlockSpec((TR, K), lambda r: (r, 0)),
        ),
        compiler_params=pltpu.CompilerParams(
            dimension_semantics=("parallel",),
            vmem_limit_bytes=vmem_limit),
        cost_estimate=pl.CostEstimate(
            flops=6 * R * K,
            transcendentals=R * K,
            bytes_accessed=2 * R * K * itemsize + R * 4),
    )(vl, Xf)

    if Rp != R:
        out = out[:R]
    return out.reshape(B, Q, K)


class Attention:
    """Mirror of the PyTorch base class (forward is abstract)."""

    def forward(self, queries, keys, values, valid_lens=None):
        # TODO(synk): base class in PyTorch raises NotImplementedError; concrete
        # subclasses (additive / scaled-dot-product attention) build the scores
        # and call _masked_softmax below.
        raise NotImplementedError

    def _masked_softmax(self, X, valid_lens=None):
        return masked_softmax(X, valid_lens)


def _reference_masked_softmax(X, valid_lens):
    """Pure-JAX reference for the correctness check."""
    B, Q, K = X.shape
    Xf = X.astype(jnp.float32)
    if valid_lens is None:
        return jax.nn.softmax(Xf, axis=-1)
    if valid_lens.ndim == 1:
        vl = jnp.broadcast_to(valid_lens[:, None], (B, Q))
    else:
        vl = valid_lens.reshape(B, Q)
    mask = jnp.arange(K)[None, None, :] < vl[:, :, None]
    Xm = jnp.where(mask, Xf, -1.0e6)
    return jax.nn.softmax(Xm, axis=-1)


if __name__ == "__main__":
    key = jax.random.PRNGKey(0)
    attn = Attention()
    k1, k2, k3 = jax.random.split(key, 3)

    # Case 1: aligned shapes, per-batch (B,) valid lens, f32.
    B, Q, K = 2, 8, 128
    X = jax.random.normal(k1, (B, Q, K), dtype=jnp.float32)
    vlens = jnp.array([3, 60], dtype=jnp.int32)

    out = attn._masked_softmax(X, vlens)
    jax.block_until_ready(out)
    assert jnp.allclose(out, _reference_masked_softmax(X, vlens), atol=1e-5, rtol=1e-5)

    out_none = attn._masked_softmax(X, None)
    jax.block_until_ready(out_none)
    assert jnp.allclose(out_none, _reference_masked_softmax(X, None), atol=1e-5, rtol=1e-5)

    # Case 2: (B, Q) valid lens with non-aligned Q / K (exercises the
    # full-extent-K block and the partial boundary row block).
    B2, Q2, K2 = 2, 10, 100
    X2 = jax.random.normal(k2, (B2, Q2, K2), dtype=jnp.float32)
    vlens2 = jax.random.randint(k3, (B2, Q2), 1, K2 + 1, dtype=jnp.int32)
    out2 = attn._masked_softmax(X2, vlens2)
    jax.block_until_ready(out2)
    assert jnp.allclose(out2, _reference_masked_softmax(X2, vlens2), atol=1e-5, rtol=1e-5)

    # Case 2b: valid_len == 0 rows with K % 128 != 0 must give exactly 1/K.
    vlens2b = vlens2.at[0, 0].set(0)
    out2b = attn._masked_softmax(X2, vlens2b)
    jax.block_until_ready(out2b)
    assert jnp.allclose(out2b, _reference_masked_softmax(X2, vlens2b), atol=1e-5, rtol=1e-5)
    assert jnp.allclose(out2b[0, 0], jnp.full((K2,), 1.0 / K2), atol=1e-6)

    # Case 3: bf16 scores — HBM traffic stays bf16, compute is f32 in-kernel.
    Xb = X.astype(jnp.bfloat16)
    outb = attn._masked_softmax(Xb, vlens)
    jax.block_until_ready(outb)
    refb = _reference_masked_softmax(Xb, vlens).astype(jnp.bfloat16)
    assert outb.dtype == jnp.bfloat16
    assert jnp.allclose(outb.astype(jnp.float32), refb.astype(jnp.float32),
                        atol=1e-2, rtol=1e-2)

    print("KERNEL_OK")
</pallas_src>

<mosaic_0001>
module attributes {stable_mosaic.version = 11 : i64} {
  func.func @_masked_softmax_kernel(%arg0: i32, %arg1: memref<16x1xi32, #tpu.memory_space<vmem>>, %arg2: memref<16x128xf32, #tpu.memory_space<vmem>>, %arg3: memref<16x128xf32, #tpu.memory_space<vmem>>) attributes {dimension_semantics = [#tpu.dimension_semantics<parallel>], iteration_bounds = array<i64: 1>, scalar_prefetch = 0 : i64, scratch_operands = 0 : i64, tpu.core_type = #tpu.core_type<tc>, window_params = [{transform_indices = @transform_0, window_bounds = array<i64: 16, 1>}, {transform_indices = @transform_1, window_bounds = array<i64: 16, 128>}, {transform_indices = @transform_2, window_bounds = array<i64: 16, 128>}]} {
    %c0 = arith.constant 0 : index
    %c0_0 = arith.constant 0 : index
    %0 = vector.load %arg2[%c0, %c0_0] : memref<16x128xf32, #tpu.memory_space<vmem>>, vector<16x128xf32>
    %c0_1 = arith.constant 0 : index
    %c0_2 = arith.constant 0 : index
    %1 = vector.load %arg1[%c0_1, %c0_2] : memref<16x1xi32, #tpu.memory_space<vmem>>, vector<16x1xi32>
    %2 = tpu.iota {dimensions = array<i32: 1>} : vector<1x128xi32>
    %3 = vector.broadcast %2 : vector<1x128xi32> to vector<16x128xi32>
    %4 = vector.broadcast %1 : vector<16x1xi32> to vector<16x128xi32>
    %5 = arith.cmpi slt, %3, %4 : vector<16x128xi32>
    %cst = arith.constant -1.000000e+06 : f32
    %6 = vector.broadcast %cst : f32 to vector<16x128xf32>
    %7 = arith.select %5, %0, %6 : vector<16x128xi1>, vector<16x128xf32>
    %cst_3 = arith.constant dense<0xFF800000> : vector<16xf32>
    %8 = vector.multi_reduction <maximumf>, %7, %cst_3 [1] : vector<16x128xf32> to vector<16xf32>
    %9 = vector.shape_cast %8 : vector<16xf32> to vector<16x1xf32>
    %10 = vector.broadcast %9 : vector<16x1xf32> to vector<16x128xf32>
    %11 = arith.subf %7, %10 : vector<16x128xf32>
    %12 = math.exp %11 : vector<16x128xf32>
    %cst_4 = arith.constant dense<0.000000e+00> : vector<16xf32>
    %13 = vector.multi_reduction <add>, %12, %cst_4 [1] : vector<16x128xf32> to vector<16xf32>
    %14 = vector.shape_cast %13 : vector<16xf32> to vector<16x1xf32>
    %15 = tpu.reciprocal %14 {approx = true} : vector<16x1xf32> -> vector<16x1xf32>
    %16 = arith.mulf %14, %15 : vector<16x1xf32>
    %cst_5 = arith.constant 2.000000e+00 : f32
    %17 = vector.broadcast %cst_5 : f32 to vector<16x1xf32>
    %18 = arith.subf %17, %16 : vector<16x1xf32>
    %19 = arith.mulf %15, %18 : vector<16x1xf32>
    %20 = vector.broadcast %19 : vector<16x1xf32> to vector<16x128xf32>
    %21 = arith.mulf %12, %20 : vector<16x128xf32>
    %c0_6 = arith.constant 0 : index
    %c0_7 = arith.constant 0 : index
    %22 = vector.load %arg3[%c0_6, %c0_7] : memref<16x128xf32, #tpu.memory_space<vmem>>, vector<16x128xf32>
    tpu.vector_store %arg3[%c0_6, %c0_7], %21 {strides = array<i32>} : memref<16x128xf32, #tpu.memory_space<vmem>>, vector<16x128xf32>,
    return
  }
  func.func @transform_0(%arg0: i32) -> (i32, i32) {
    %c0_i32 = arith.constant 0 : i32
    %c0_i32_0 = arith.constant 0 : i32
    return %arg0, %c0_i32 : i32, i32
  }
  func.func @transform_1(%arg0: i32) -> (i32, i32) {
    %c0_i32 = arith.constant 0 : i32
    %c0_i32_0 = arith.constant 0 : i32
    return %arg0, %c0_i32 : i32, i32
  }
  func.func @transform_2(%arg0: i32) -> (i32, i32) {
    %c0_i32 = arith.constant 0 : i32
    %c0_i32_0 = arith.constant 0 : i32
    return %arg0, %c0_i32 : i32, i32
  }
}

</mosaic_0001>

<llo_original>
// kernel: tpu_custom_call.1
$region0: #{tpu_custom_call.1}
  #allocation0 [shape = 'u32[]', space=smem, size = 0x4, offset = 0x4, fixed_abs, tag = 'smem constant byte address 0x4 - core index']
  #allocation1 [shape = 'u32[144,128]{1,0:T(1,128)}', space=vmem, size = 0x12000, scoped, tag = 'internal scratch']
  %s0 = inlined_call_operand.vmem [shape: s32[16,1], index: 0, kind: input, shape index: {}]
  %s1 = inlined_call_operand.vmem [shape: f32[16,128], index: 1, kind: input, shape index: {}]
  %s2 = inlined_call_operand.hbm [shape: f32[16,128], index: 2, kind: output, shape index: {}]
  %s3 = sld [smem:[#allocation0]]
  $region18: #{tpu_custom_call.1} parent=0
    _
  %s5 = ssub.s32 1, %s3
  %s6 = scalar_select 0, %s5, %s3
  $region1: #{tpu_custom_call.1} parent=0
    #allocation2 [shape = 'u8[8192]{0}', space=vmem, size = 0x2000, scoped, tag = 'output window, operand 0, single buffered']
    #allocation3 [shape = 's32[1]{0}', space=sflag, size = 0x4, scoped, tag = 'scoped memory for tpu_custom_call.1']
    %7 = vsyncpa [#allocation3], 0
    // Predicated region
    $region2: #{tpu_custom_call.1} parent=1 // pred_check
      _
    $region3: #{tpu_custom_call.1} parent=1 // pred_check_branch
      %9 = sbr.rel (0) target = $region5
    $region4: #{tpu_custom_call.1} parent=1 // pred_region
      _
    $region5: #{tpu_custom_call.1} parent=1 // pred_fallthru
      _
    // Predicated region
    $region6: #{tpu_custom_call.1} parent=1 // pred_check
      _
    $region7: #{tpu_custom_call.1} parent=1 // pred_check_branch
      %11 = sbr.rel (0) target = $region9
    $region8: #{tpu_custom_call.1} parent=1 // pred_region
      _
    $region9: #{tpu_custom_call.1} parent=1 // pred_fallthru
      _
    %v12 = vld [vmem:[%s1] sm:$0xff]
    %v13 = vld [vmem:[%s1 + $0x8] sm:$0xff]
    %v14 = vld [vmem:[%s0] sm:$0xff]
    %v15 = vld [vmem:[%s0 + $0x8] sm:$0xff]
    %v16 = vlaneseq
    %v17 = vand.u32 %v16, 127
    %18 = vset.pattern.permute.xlu0 0
    %19 = vperm.xlu0 %18, %v14
    %v20 = vpop.permute.xlu0 %19
    %21 = vset.pattern.permute.xlu0 0
    %22 = vperm.xlu0 %21, %v15
    %v23 = vpop.permute.xlu0 %22
    %vm24 = vcmp.lt.s32.totalorder %v17, %v20
    %vm25 = vcmp.lt.s32.totalorder %v17, %v23
    %v26 = vsel %vm24, %v12, -1000000.0
    %v27 = vsel %vm25, %v13, -1000000.0
    %28 = vmax.xlane.f32.xlu0 %v26
    %v29 = vpop.xlane.xlu0 %28
    %30 = vmax.xlane.f32.xlu0 %v27
    %v31 = vpop.xlane.xlu0 %30
    %v32 = vsub.f32 %v26, %v29
    %v33 = vsub.f32 %v27, %v31
    %v34 = vmul.f32 %v32, 1.442695
    %v35 = vpow.pop %v34
    %v36 = vmul.f32 %v33, 1.442695
    %v37 = vpow.pop %v36
    %38 = vadd.xlane.f32.xlu0 %v35
    %v39 = vpop.xlane.xlu0 %38
    %40 = vadd.xlane.f32.xlu0 %v37
    %v41 = vpop.xlane.xlu0 %40
    %v42 = vrcp.pop %v39
    %v43 = vrcp.pop %v41
    %v44 = vmul.f32 %v39, %v42
    %v45 = vmul.f32 %v41, %v43
    %v46 = vsub.f32 2.0, %v44
    %v47 = vsub.f32 2.0, %v45
    %v48 = vmul.f32 %v42, %v46
    %v49 = vmul.f32 %v43, %v47
    %v50 = vmul.f32 %v35, %v48
    %v51 = vmul.f32 %v37, %v49
    %52 = vst [vmem:[#allocation2] sm:$0xff] %v50
    %53 = vst [vmem:[#allocation2 + $0x8] sm:$0xff] %v51
    // Predicated region
    $region10: #{tpu_custom_call.1} parent=1 // pred_check
      _
    $region11: #{tpu_custom_call.1} parent=1 // pred_check_branch
      %55 = sbr.rel (0) target = $region13
    $region12: #{tpu_custom_call.1} parent=1 // pred_region
      %s57 = ssub.s32 256, 256
      %58 = vsyncadd [#allocation3], %s57
      %s59 = sshll.u32 [#allocation2], 4
      %s60 = int_to_ptr.vmem [resolvable:$true] %s59
      %65 = dma.vmem_to_hbm [thread:$0]  %s60, 256, %s2, [#allocation3], 128, 128, 8
    $region13: #{tpu_custom_call.1} parent=1 // pred_fallthru
      _
    // Predicated region
    $region14: #{tpu_custom_call.1} parent=1 // pred_check
      _
    $region15: #{tpu_custom_call.1} parent=1 // pred_check_branch
      %67 = sbr.rel (0) target = $region17
    $region16: #{tpu_custom_call.1} parent=1 // pred_region
      %68 = dma.done [#allocation3], 256
    $region17: #{tpu_custom_call.1} parent=1 // pred_fallthru
      _
    %69 = vsyncpa [#allocation3], 1

</llo_original>
